<compile_context>
chip_gen: v5e
topology: v5e:2x2
jax: 0.10.0
libtpu: 0.0.40
codegen_flags: <defaults>
</compile_context>

<pallas_src>
import functools

import jax
import jax.numpy as jnp
from jax.experimental import pallas as pl
from jax.experimental.pallas import tpu as pltpu


def _round_up(n: int, m: int) -> int:
    return ((n + m - 1) // m) * m


def _messaging_kernel(x1_ref, m0_ref, w1_ref, w2_ref, b_ref, o_ref):
    # Two accumulated MXU dots replace cat([x1, m0], 1) @ W.T .
    y = jnp.dot(x1_ref[...], w1_ref[...], preferred_element_type=jnp.float32)
    y = y + jnp.dot(m0_ref[...], w2_ref[...], preferred_element_type=jnp.float32)
    y = y + b_ref[...]                       # (1, F_pad) lane broadcast
    o_ref[...] = jax.nn.sigmoid(y).astype(o_ref.dtype)


def prepare_params(weight, bias, *, lane: int = 128):
    """One-time parameter prep (hoisted out of the per-call path).

    weight: (F, 2F) float32, PyTorch nn.Linear [out, in] layout.
    bias:   (F,)    float32
    Returns (w1, w2, b2) with shapes (F, F_pad), (F, F_pad), (1, F_pad) where
    F_pad = round_up(F, 128) so the kernel's output is lane-dense.
    """
    f_out, two_f = weight.shape
    f_in = two_f // 2
    assert two_f == 2 * f_out, "expected Linear(2F -> F)"
    f_pad = _round_up(f_out, lane)
    pad_n = f_pad - f_out

    w1 = jnp.pad(weight[:, :f_in].T, ((0, 0), (0, pad_n)))   # (F, F_pad), (K,N)
    w2 = jnp.pad(weight[:, f_in:].T, ((0, 0), (0, pad_n)))   # (F, F_pad)
    b2 = jnp.pad(bias, (0, pad_n)).reshape(1, f_pad)          # (1, F_pad)
    return w1, w2, b2


@functools.partial(jax.jit, static_argnames=("tile_e",))
def hyperedge_to_node_messaging(x_1, m_0, w1, w2, b2, *, tile_e: int = 512):
    """sigmoid(cat([x_1, m_0], 1) @ weight.T + bias) via split-dot Pallas kernel.

    x_1, m_0 : (E, F) float32
    w1, w2, b2: outputs of prepare_params (pre-split / padded weights).
    """
    E, F = x_1.shape
    f_pad = w1.shape[1]

    # Row tiling: clamp tile for tiny inputs, keep rows a multiple of 8 (f32
    # sublanes); pad E so the grid divides evenly and slice afterwards.
    te = min(tile_e, _round_up(E, 8))
    e_pad = _round_up(E, te)
    if e_pad != E:
        x_1 = jnp.pad(x_1, ((0, e_pad - E), (0, 0)))
        m_0 = jnp.pad(m_0, ((0, e_pad - E), (0, 0)))
    n_tiles = e_pad // te

    cost = pl.CostEstimate(
        flops=2 * e_pad * (2 * F) * f_pad,
        transcendentals=e_pad * f_pad,
        bytes_accessed=4 * (2 * e_pad * F + 2 * F * f_pad + f_pad + e_pad * f_pad),
    )

    out = pl.pallas_call(
        _messaging_kernel,
        out_shape=jax.ShapeDtypeStruct((e_pad, f_pad), x_1.dtype),
        grid_spec=pl.GridSpec(
            grid=(n_tiles,),
            in_specs=[
                pl.BlockSpec((te, F), lambda i: (i, 0)),       # x_1 row tile
                pl.BlockSpec((te, F), lambda i: (i, 0)),       # m_0 row tile
                pl.BlockSpec((F, f_pad), lambda i: (0, 0)),    # W1 resident
                pl.BlockSpec((F, f_pad), lambda i: (0, 0)),    # W2 resident
                pl.BlockSpec((1, f_pad), lambda i: (0, 0)),    # bias resident
            ],
            out_specs=pl.BlockSpec((te, f_pad), lambda i: (i, 0)),
        ),
        compiler_params=pltpu.CompilerParams(
            dimension_semantics=("parallel",),   # shard row tiles across TCs (v7x)
        ),
        cost_estimate=cost,
    )(x_1, m_0, w1, w2, b2)

    return out[:E, :F]


def _reference(x_1, m_0, weight, bias):
    xc = jnp.concatenate([x_1, m_0], axis=1)
    return jax.nn.sigmoid(xc @ weight.T + bias)


if __name__ == "__main__":
    in_features = 32       # F
    num_edges = 8          # E (rows of x_1 / m_0)

    key = jax.random.PRNGKey(0)
    k_x1, k_m0, k_w, k_b = jax.random.split(key, 4)

    x_1 = jax.random.normal(k_x1, (num_edges, in_features), dtype=jnp.float32)
    m_0 = jax.random.normal(k_m0, (num_edges, in_features), dtype=jnp.float32)

    # Deterministic init mimicking nn.Linear default: U(-1/sqrt(fan_in), ...)
    fan_in = 2 * in_features
    bound = 1.0 / jnp.sqrt(fan_in)
    weight = jax.random.uniform(
        k_w, (in_features, 2 * in_features), minval=-bound, maxval=bound,
        dtype=jnp.float32)
    bias = jax.random.uniform(
        k_b, (in_features,), minval=-bound, maxval=bound, dtype=jnp.float32)

    # One-time parameter prep (split + transpose + lane padding).
    w1, w2, b2 = prepare_params(weight, bias)

    out = hyperedge_to_node_messaging(x_1, m_0, w1, w2, b2)
    out = jax.block_until_ready(out)

    ref = _reference(x_1, m_0, weight, bias)
    assert out.shape == (num_edges, in_features)
    assert jnp.allclose(out, ref, atol=1e-5, rtol=1e-5), "mismatch vs reference"

    print("KERNEL_OK")
</pallas_src>

<mosaic_0001>
module attributes {stable_mosaic.version = 11 : i64} {
  func.func @_messaging_kernel(%arg0: i32, %arg1: memref<8x32xf32, #tpu.memory_space<vmem>>, %arg2: memref<8x32xf32, #tpu.memory_space<vmem>>, %arg3: memref<32x128xf32, #tpu.memory_space<vmem>>, %arg4: memref<32x128xf32, #tpu.memory_space<vmem>>, %arg5: memref<1x128xf32, #tpu.memory_space<vmem>>, %arg6: memref<8x128xf32, #tpu.memory_space<vmem>>) attributes {dimension_semantics = [#tpu.dimension_semantics<parallel>], iteration_bounds = array<i64: 1>, scalar_prefetch = 0 : i64, scratch_operands = 0 : i64, tpu.core_type = #tpu.core_type<tc>, window_params = [{transform_indices = @transform_0, window_bounds = array<i64: 8, 32>}, {transform_indices = @transform_1, window_bounds = array<i64: 8, 32>}, {pipeline_mode = #tpu.pipeline_mode<synchronous>, transform_indices = @transform_2, window_bounds = array<i64: 32, 128>}, {pipeline_mode = #tpu.pipeline_mode<synchronous>, transform_indices = @transform_3, window_bounds = array<i64: 32, 128>}, {pipeline_mode = #tpu.pipeline_mode<synchronous>, transform_indices = @transform_4, window_bounds = array<i64: 1, 128>}, {transform_indices = @transform_5, window_bounds = array<i64: 8, 128>}]} {
    %c0 = arith.constant 0 : index
    %c0_0 = arith.constant 0 : index
    %0 = vector.load %arg1[%c0, %c0_0] : memref<8x32xf32, #tpu.memory_space<vmem>>, vector<8x32xf32>
    %c0_1 = arith.constant 0 : index
    %c0_2 = arith.constant 0 : index
    %1 = vector.load %arg3[%c0_1, %c0_2] : memref<32x128xf32, #tpu.memory_space<vmem>>, vector<32x128xf32>
    %cst = arith.constant dense<0.000000e+00> : vector<8x128xf32>
    %2 = tpu.matmul %0, %1, %cst {dimension_numbers = #tpu.dot_dimension_numbers<[1], [0], [0], [1], [0, 0, 1, 1], [], []>} : vector<8x32xf32>, vector<32x128xf32>, vector<8x128xf32> -> vector<8x128xf32>
    %c0_3 = arith.constant 0 : index
    %c0_4 = arith.constant 0 : index
    %3 = vector.load %arg2[%c0_3, %c0_4] : memref<8x32xf32, #tpu.memory_space<vmem>>, vector<8x32xf32>
    %c0_5 = arith.constant 0 : index
    %c0_6 = arith.constant 0 : index
    %4 = vector.load %arg4[%c0_5, %c0_6] : memref<32x128xf32, #tpu.memory_space<vmem>>, vector<32x128xf32>
    %cst_7 = arith.constant dense<0.000000e+00> : vector<8x128xf32>
    %5 = tpu.matmul %3, %4, %cst_7 {dimension_numbers = #tpu.dot_dimension_numbers<[1], [0], [0], [1], [0, 0, 1, 1], [], []>} : vector<8x32xf32>, vector<32x128xf32>, vector<8x128xf32> -> vector<8x128xf32>
    %6 = arith.addf %2, %5 : vector<8x128xf32>
    %c0_8 = arith.constant 0 : index
    %c0_9 = arith.constant 0 : index
    %7 = vector.load %arg5[%c0_8, %c0_9] : memref<1x128xf32, #tpu.memory_space<vmem>>, vector<1x128xf32>
    %8 = vector.broadcast %7 : vector<1x128xf32> to vector<8x128xf32>
    %9 = arith.addf %6, %8 : vector<8x128xf32>
    %10 = arith.negf %9 : vector<8x128xf32>
    %11 = math.exp %10 : vector<8x128xf32>
    %cst_10 = arith.constant 1.000000e+00 : f32
    %12 = vector.broadcast %cst_10 : f32 to vector<8x128xf32>
    %13 = arith.addf %12, %11 : vector<8x128xf32>
    %14 = arith.divf %12, %13 : vector<8x128xf32>
    %c0_11 = arith.constant 0 : index
    %c0_12 = arith.constant 0 : index
    %15 = vector.load %arg6[%c0_11, %c0_12] : memref<8x128xf32, #tpu.memory_space<vmem>>, vector<8x128xf32>
    tpu.vector_store %arg6[%c0_11, %c0_12], %14 {strides = array<i32>} : memref<8x128xf32, #tpu.memory_space<vmem>>, vector<8x128xf32>,
    return
  }
  func.func @transform_0(%arg0: i32) -> (i32, i32) {
    %c0_i32 = arith.constant 0 : i32
    %c0_i32_0 = arith.constant 0 : i32
    return %arg0, %c0_i32 : i32, i32
  }
  func.func @transform_1(%arg0: i32) -> (i32, i32) {
    %c0_i32 = arith.constant 0 : i32
    %c0_i32_0 = arith.constant 0 : i32
    return %arg0, %c0_i32 : i32, i32
  }
  func.func @transform_2(%arg0: i32) -> (i32, i32) {
    %c0_i32 = arith.constant 0 : i32
    %c0_i32_0 = arith.constant 0 : i32
    %c0_i32_1 = arith.constant 0 : i32
    return %c0_i32, %c0_i32_0 : i32, i32
  }
  func.func @transform_3(%arg0: i32) -> (i32, i32) {
    %c0_i32 = arith.constant 0 : i32
    %c0_i32_0 = arith.constant 0 : i32
    %c0_i32_1 = arith.constant 0 : i32
    return %c0_i32, %c0_i32_0 : i32, i32
  }
  func.func @transform_4(%arg0: i32) -> (i32, i32) {
    %c0_i32 = arith.constant 0 : i32
    %c0_i32_0 = arith.constant 0 : i32
    %c0_i32_1 = arith.constant 0 : i32
    return %c0_i32, %c0_i32_0 : i32, i32
  }
  func.func @transform_5(%arg0: i32) -> (i32, i32) {
    %c0_i32 = arith.constant 0 : i32
    %c0_i32_0 = arith.constant 0 : i32
    return %arg0, %c0_i32 : i32, i32
  }
}

</mosaic_0001>

<llo_original>
// kernel: hyperedge_to_node_messaging.1
$region0: #{hyperedge_to_node_messaging.1}
  #allocation0 [shape = 'u32[]', space=smem, size = 0x4, offset = 0x4, fixed_abs, tag = 'smem constant byte address 0x4 - core index']
  #allocation1 [shape = 'u32[72,128]{1,0:T(1,128)}', space=vmem, size = 0x9000, scoped, tag = 'internal scratch']
  %s0 = inlined_call_operand.hbm [shape: f32[8,32], index: 0, kind: input, shape index: {}]
  %s1 = inlined_call_operand.hbm [shape: f32[8,32], index: 1, kind: input, shape index: {}]
  %s2 = inlined_call_operand.hbm [shape: f32[32,128], index: 2, kind: input, shape index: {}]
  %s3 = inlined_call_operand.hbm [shape: f32[32,128], index: 3, kind: input, shape index: {}]
  %s4 = inlined_call_operand.vmem [shape: f32[1,128], index: 4, kind: input, shape index: {}]
  %s5 = inlined_call_operand.hbm [shape: f32[8,128], index: 5, kind: output, shape index: {}]
  %s6 = sld [smem:[#allocation0]]
  $region46: #{hyperedge_to_node_messaging.1} parent=0
    _
  %s8 = ssub.s32 1, %s6
  %s9 = scalar_select 0, %s8, %s6
  $region1: #{hyperedge_to_node_messaging.1} parent=0
    #allocation2 [shape = 'u8[4096]{0}', space=vmem, size = 0x1000, scoped, tag = 'input window, operand 0, single buffered']
    #allocation3 [shape = 's32[1]{0}', space=sflag, size = 0x4, scoped, tag = 'scoped memory for hyperedge_to_node_messaging.1']
    #allocation4 [shape = 's32[1]{0}', space=sflag, size = 0x4, scoped, tag = 'scoped memory for hyperedge_to_node_messaging.1']
    #allocation5 [shape = 'u8[4096]{0}', space=vmem, size = 0x1000, scoped, tag = 'input window, operand 1, single buffered']
    #allocation6 [shape = 's32[1]{0}', space=sflag, size = 0x4, scoped, tag = 'scoped memory for hyperedge_to_node_messaging.1']
    #allocation7 [shape = 'u8[16384]{0}', space=vmem, size = 0x4000, scoped, tag = 'input window, operand 2, single buffered']
    #allocation8 [shape = 'u8[16384]{0}', space=vmem, size = 0x4000, scoped, tag = 'input window, operand 3, single buffered']
    #allocation9 [shape = 's32[1]{0}', space=sflag, size = 0x4, scoped, tag = 'scoped memory for hyperedge_to_node_messaging.1']
    #allocation10 [shape = 'u8[4096]{0}', space=vmem, size = 0x1000, scoped, tag = 'output window, operand 0, single buffered']
    %10 = vsyncpa [#allocation3], 0
    %11 = vsyncpa [#allocation6], 0
    %12 = vsyncpa [#allocation9], 0
    %13 = vsyncpa [#allocation4], 0
    // Predicated region
    $region2: #{hyperedge_to_node_messaging.1} parent=1 // pred_check
      _
    $region3: #{hyperedge_to_node_messaging.1} parent=1 // pred_check_branch
      %15 = sbr.rel (0) target = $region5
    $region4: #{hyperedge_to_node_messaging.1} parent=1 // pred_region
      %17 = vsyncadd [#allocation3], 0
      %s19 = sshll.u32 %s0, 4
      %s20 = int_to_ptr.hbm [resolvable:$true] %s19
      %s21 = sshll.u32 [#allocation2], 4
      %s22 = int_to_ptr.vmem [resolvable:$true] %s21
      %24 = dma.hbm_to_vmem [thread:$0]  %s20, 128, %s22, [#allocation3]
    $region5: #{hyperedge_to_node_messaging.1} parent=1 // pred_fallthru
      _
    // Predicated region
    $region6: #{hyperedge_to_node_messaging.1} parent=1 // pred_check
      _
    $region7: #{hyperedge_to_node_messaging.1} parent=1 // pred_check_branch
      %26 = sbr.rel (0) target = $region9
    $region8: #{hyperedge_to_node_messaging.1} parent=1 // pred_region
      %28 = vsyncadd [#allocation6], 0
      %s30 = sshll.u32 %s1, 4
      %s31 = int_to_ptr.hbm [resolvable:$true] %s30
      %s32 = sshll.u32 [#allocation5], 4
      %s33 = int_to_ptr.vmem [resolvable:$true] %s32
      %35 = dma.hbm_to_vmem [thread:$0]  %s31, 128, %s33, [#allocation6]
    $region9: #{hyperedge_to_node_messaging.1} parent=1 // pred_fallthru
      _
    // Predicated region
    $region10: #{hyperedge_to_node_messaging.1} parent=1 // pred_check
      _
    $region11: #{hyperedge_to_node_messaging.1} parent=1 // pred_check_branch
      %37 = sbr.rel (0) target = $region13
    $region12: #{hyperedge_to_node_messaging.1} parent=1 // pred_region
      %39 = vsyncadd [#allocation6], 0
      %s40 = sshll.u32 %s2, 4
      %s41 = int_to_ptr.hbm [resolvable:$true] %s40
      %s42 = sshll.u32 [#allocation7], 4
      %s43 = int_to_ptr.vmem [resolvable:$true] %s42
      %48 = dma.hbm_to_vmem [thread:$0]  %s41, 512, %s43, [#allocation6], 128, 128, 8
    $region13: #{hyperedge_to_node_messaging.1} parent=1 // pred_fallthru
      _
    // Predicated region
    $region14: #{hyperedge_to_node_messaging.1} parent=1 // pred_check
      _
    $region15: #{hyperedge_to_node_messaging.1} parent=1 // pred_check_branch
      %50 = sbr.rel (0) target = $region17
    $region16: #{hyperedge_to_node_messaging.1} parent=1 // pred_region
      %52 = vsyncadd [#allocation9], 0
      %s53 = sshll.u32 %s3, 4
      %s54 = int_to_ptr.hbm [resolvable:$true] %s53
      %s55 = sshll.u32 [#allocation8], 4
      %s56 = int_to_ptr.vmem [resolvable:$true] %s55
      %61 = dma.hbm_to_vmem [thread:$0]  %s54, 512, %s56, [#allocation9], 128, 128, 8
    $region17: #{hyperedge_to_node_messaging.1} parent=1 // pred_fallthru
      _
    // Predicated region
    $region18: #{hyperedge_to_node_messaging.1} parent=1 // pred_check
      _
    $region19: #{hyperedge_to_node_messaging.1} parent=1 // pred_check_branch
      %63 = sbr.rel (0) target = $region21
    $region20: #{hyperedge_to_node_messaging.1} parent=1 // pred_region
      _
    $region21: #{hyperedge_to_node_messaging.1} parent=1 // pred_fallthru
      _
    // Predicated region
    $region22: #{hyperedge_to_node_messaging.1} parent=1 // pred_check
      _
    $region23: #{hyperedge_to_node_messaging.1} parent=1 // pred_check_branch
      %65 = sbr.rel (0) target = $region25
    $region24: #{hyperedge_to_node_messaging.1} parent=1 // pred_region
      %67 = dma.done [#allocation3], 128
    $region25: #{hyperedge_to_node_messaging.1} parent=1 // pred_fallthru
      _
    // Predicated region
    $region26: #{hyperedge_to_node_messaging.1} parent=1 // pred_check
      _
    $region27: #{hyperedge_to_node_messaging.1} parent=1 // pred_check_branch
      %69 = sbr.rel (0) target = $region29
    $region28: #{hyperedge_to_node_messaging.1} parent=1 // pred_region
      %71 = dma.done [#allocation6], 128
    $region29: #{hyperedge_to_node_messaging.1} parent=1 // pred_fallthru
      _
    // Predicated region
    $region30: #{hyperedge_to_node_messaging.1} parent=1 // pred_check
      _
    $region31: #{hyperedge_to_node_messaging.1} parent=1 // pred_check_branch
      %73 = sbr.rel (0) target = $region33
    $region32: #{hyperedge_to_node_messaging.1} parent=1 // pred_region
      %75 = dma.done [#allocation6], 512
    $region33: #{hyperedge_to_node_messaging.1} parent=1 // pred_fallthru
      _
    // Predicated region
    $region34: #{hyperedge_to_node_messaging.1} parent=1 // pred_check
      _
    $region35: #{hyperedge_to_node_messaging.1} parent=1 // pred_check_branch
      %77 = sbr.rel (0) target = $region37
    $region36: #{hyperedge_to_node_messaging.1} parent=1 // pred_region
      %79 = dma.done [#allocation9], 512
    $region37: #{hyperedge_to_node_messaging.1} parent=1 // pred_fallthru
      _
    %v80 = vld [vmem:[#allocation2] sm:$0xff]
    %v81 = vld [vmem:[#allocation7] sm:$0xff]
    %v82 = vld [vmem:[#allocation7 + $0x8] sm:$0xff]
    %v83 = vld [vmem:[#allocation7 + $0x10] sm:$0xff]
    %v84 = vld [vmem:[#allocation7 + $0x18] sm:$0xff]
    %v85 = vld [vmem:[#allocation5] sm:$0xff]
    %v86 = vld [vmem:[#allocation8] sm:$0xff]
    %v87 = vld [vmem:[#allocation8 + $0x8] sm:$0xff]
    %v88 = vld [vmem:[#allocation8 + $0x10] sm:$0xff]
    %v89 = vld [vmem:[#allocation8 + $0x18] sm:$0xff]
    %vm90 = vcmask 261120
    %v92 = vsel %vm90, %v85, 0
    %94 = vmatpush.msra.mxu0 0.0
    %95 = vmatpush.msra.mxu0 0.0
    %96 = vmatpush.msra.mxu0 0.0
    %97 = vmatpush.msra.mxu0 0.0
    %98 = vmatpush.msra.mxu0 0.0
    %99 = vmatpush.msra.mxu0 0.0
    %100 = vmatpush.msra.mxu0 0.0
    %101 = vmatpush.msra.mxu0 0.0
    %102 = vmatpush.msra.mxu0 0.0
    %103 = vmatpush.msra.mxu0 0.0
    %104 = vmatpush.msra.mxu0 0.0
    %105 = vmatpush.msra.mxu0 0.0
    %106 = vmatpush.msra.mxu0 %v89
    %107 = vmatpush.msra.mxu0 %v88
    %108 = vmatpush.msra.mxu0 %v87
    %109 = vmatpush.msra.mxu0 %v86
    %110 = vmatmul.f32.gmra.mxu0 %v92
    %v111 = vpop.f32.mrf.mxu0
    %v112 = vadd.f32 0.0, %v111
    %113 = vdwg.mxu0
    %v115 = vsel %vm90, %v80, 0
    %117 = vmatpush.msra.mxu0 0.0
    %118 = vmatpush.msra.mxu0 0.0
    %119 = vmatpush.msra.mxu0 0.0
    %120 = vmatpush.msra.mxu0 0.0
    %121 = vmatpush.msra.mxu0 0.0
    %122 = vmatpush.msra.mxu0 0.0
    %123 = vmatpush.msra.mxu0 0.0
    %124 = vmatpush.msra.mxu0 0.0
    %125 = vmatpush.msra.mxu0 0.0
    %126 = vmatpush.msra.mxu0 0.0
    %127 = vmatpush.msra.mxu0 0.0
    %128 = vmatpush.msra.mxu0 0.0
    %129 = vmatpush.msra.mxu0 %v84
    %130 = vmatpush.msra.mxu0 %v83
    %131 = vmatpush.msra.mxu0 %v82
    %132 = vmatpush.msra.mxu0 %v81
    %133 = vmatmul.f32.gmra.mxu0 %v115
    %v134 = vpop.f32.mrf.mxu0
    %v135 = vadd.f32 %v112, %v134
    %136 = vdwg.mxu0
    %v137 = vld [vmem:[%s4] sm:$0x1]
    %v139 = vperm.slane %v137, 0
    %v141 = vadd.f32 %v135, %v139
    %v142 = vxor.u32 %v141, 2147483648
    %v143 = vmul.f32 %v142, 1.442695
    %v144 = vpow.pop %v143
    %v145 = vadd.f32 %v144, 1.0
    %v146 = vrcp.pop %v145
    %v147 = vmul.f32 %v145, %v146
    %v148 = vsub.f32 1.0, %v147
    %v149 = vmul.f32 %v146, %v148
    %v150 = vadd.f32 %v146, %v149
    %vm151 = vweird.f32 %v145
    %vm152 = vweird.f32 %v146
    %vm153 = vmor %vm151, %vm152
    %v154 = vsel %vm153, %v146, %v150
    %v155 = vand.u32 2147483647, %v145
    %vm156 = vcmp.eq.f32.partialorder %v155, 8.507059e+37
    %v157 = vand.u32 %v145, 2147483648
    %v158 = vor.u32 1.1754944e-38, %v157
    %v159 = vsel %vm156, %v158, %v154
    %v160 = vmul.f32 1.0, %v159
    %161 = vst [vmem:[#allocation10] sm:$0xff] %v160
    // Predicated region
    $region38: #{hyperedge_to_node_messaging.1} parent=1 // pred_check
      _
    $region39: #{hyperedge_to_node_messaging.1} parent=1 // pred_check_branch
      %163 = sbr.rel (0) target = $region41
    $region40: #{hyperedge_to_node_messaging.1} parent=1 // pred_region
      %165 = vsyncadd [#allocation4], 0
      %s167 = sshll.u32 [#allocation10], 4
      %s168 = int_to_ptr.vmem [resolvable:$true] %s167
      %s169 = sshll.u32 %s5, 4
      %s170 = int_to_ptr.hbm [resolvable:$true] %s169
      %172 = dma.vmem_to_hbm [thread:$0]  %s168, 128, %s170, [#allocation4]
    $region41: #{hyperedge_to_node_messaging.1} parent=1 // pred_fallthru
      _
    // Predicated region
    $region42: #{hyperedge_to_node_messaging.1} parent=1 // pred_check
      _
    $region43: #{hyperedge_to_node_messaging.1} parent=1 // pred_check_branch
      %174 = sbr.rel (0) target = $region45
    $region44: #{hyperedge_to_node_messaging.1} parent=1 // pred_region
      %176 = dma.done [#allocation4], 128
    $region45: #{hyperedge_to_node_messaging.1} parent=1 // pred_fallthru
      _
    %177 = vsyncpa [#allocation3], 1
    %178 = vsyncpa [#allocation6], 1
    %179 = vsyncpa [#allocation9], 1
    %180 = vsyncpa [#allocation4], 1

</llo_original>
